<compile_context>
chip_gen: v7x
topology: tpu7x:2x2x1
jax: 0.10.0
libtpu: 0.0.40
codegen_flags: <defaults>
</compile_context>

<pallas_src>
import jax
import jax.numpy as jnp
from jax.experimental import pallas as pl
from jax.experimental.pallas import tpu as pltpu

# ---------------------------------------------------------------------------
# Model hyper-parameters (mirroring NeuroDynExpert.__init__ defaults).
# ---------------------------------------------------------------------------
SHARED_DIM = 128            # shared_dim
NUM_MODULES = 2             # num_modules (gate packed as a difference column)
OUTPUT_DIM = 1              # output_dim
GATE_COL = NUM_MODULES * SHARED_DIM   # column index of the gate-diff logit
N_SLAB = 384                # [mod0 | mod1 | gate_diff | pad] -> 257 -> 384


def _round_up(x, m):
    return (x + m - 1) // m * m


def _pick_batch_tile(batch):
    """Large tiles to amortize per-step overhead; >=2 grid steps when batch>128
    so the 'parallel' axis shards across v7x's two TensorCores."""
    if batch <= 128:
        return _round_up(max(batch, 1), 8)
    if batch <= 2048:
        return _round_up((batch + 1) // 2, 128)
    return 1024


# ---------------------------------------------------------------------------
# Pallas kernel: fused NeuroDynArch forward for one batch tile.
# ---------------------------------------------------------------------------
def neurodyn_expert_kernel(
    x_ref,      # (TB, D_in_pad)           bf16 flattened input tile
    wc_ref,     # (D_in_pad, SHARED_DIM)   bf16 static core weight
    bc_ref,     # (1, SHARED_DIM)          f32  static core bias
    wslab_ref,  # (SHARED_DIM, N_SLAB)     bf16 [mod0 | mod1 | gate_diff | pad]
    bslab_ref,  # (1, N_SLAB)              f32  matching biases
    wout_ref,   # (8, SHARED_DIM)          bf16 head weight in row 0, rows 1-7 zero
    bout_ref,   # (1, 1)                   f32  head bias
    out_ref,    # (8, TB)                  f32  lane-major output tile; row 0 real
):
    # --- Static core: Linear + tanh (bf16 MXU, f32 accumulate) --------------
    core_f32 = jnp.tanh(
        jnp.dot(x_ref[...], wc_ref[...], preferred_element_type=jnp.float32)
        + bc_ref[...]
    )  # (TB, SHARED_DIM) f32

    # --- Fused second stage: modules + gate in ONE lane-dense matmul --------
    slab = (
        jnp.dot(core_f32.astype(jnp.bfloat16), wslab_ref[...],
                preferred_element_type=jnp.float32)
        + bslab_ref[...]
    )  # (TB, N_SLAB) f32

    # --- Mix-ratio gate: softmax over 2 classes == sigmoid(logit diff).
    #     sigmoid(d) = 0.5*(1+tanh(d/2)): overflow-safe, EUP tanh.
    d = slab[:, GATE_COL:GATE_COL + 1]                     # (TB, 1)
    mix0 = 0.5 * (jnp.tanh(0.5 * d) + 1.0)

    # --- Residual coupling, fused (NUM_MODULES == 2) -------------------------
    mixed = (
        core_f32
        + mix0 * jnp.maximum(slab[:, 0:SHARED_DIM], 0.0)
        + (1.0 - mix0) * jnp.maximum(slab[:, SHARED_DIM:2 * SHARED_DIM], 0.0)
    )  # (TB, SHARED_DIM) f32

    # --- Output head, lane-major: (8, D) x (TB, D)^T -> (8, TB); row 0 real --
    head = jax.lax.dot_general(
        wout_ref[...], mixed.astype(jnp.bfloat16),
        dimension_numbers=(((1,), (1,)), ((), ())),
        preferred_element_type=jnp.float32,
    )
    out_ref[...] = head + bout_ref[...]


# ---------------------------------------------------------------------------
# One-time parameter packing (fused / padded / bf16 weight slabs).
# ---------------------------------------------------------------------------
def pack_params(params):
    assert NUM_MODULES == 2, "gate-difference packing assumes 2 modules"
    f32, bf16 = jnp.float32, jnp.bfloat16

    # Static core weight, D_in zero-padded to a lane multiple.
    w_core = params["w_core"].astype(f32)
    d_in = w_core.shape[0]
    d_in_pad = _round_up(d_in, 128)
    if d_in_pad != d_in:
        w_core = jnp.pad(w_core, ((0, d_in_pad - d_in), (0, 0)))

    # Slab: [mod0 | mod1 | gate_logit_difference], zero-padded to N_SLAB lanes.
    w_gate = params["w_gate"].astype(f32)                     # (128, 2)
    b_gate = params["b_gate"].astype(f32)                     # (1, 2)
    w_slab = jnp.concatenate(
        [params["w_mod"][0].astype(f32),
         params["w_mod"][1].astype(f32),
         w_gate[:, 0:1] - w_gate[:, 1:2]], axis=1)            # (128, 257)
    b_slab = jnp.concatenate(
        [params["b_mod"][0].astype(f32),
         params["b_mod"][1].astype(f32),
         b_gate[:, 0:1] - b_gate[:, 1:2]], axis=1)            # (1, 257)
    n = w_slab.shape[1]
    w_slab = jnp.pad(w_slab, ((0, 0), (0, N_SLAB - n)))
    b_slab = jnp.pad(b_slab, ((0, 0), (0, N_SLAB - n)))

    # Output head packed lane-major: row 0 = head weight column, rows 1-7 zero.
    w_out = params["w_out"].astype(f32)                       # (128, 1)
    w_out_lane = jnp.zeros((8, SHARED_DIM), f32).at[0, :].set(w_out[:, 0])
    b_out = params["b_out"].astype(f32).reshape(1, 1)

    return {
        "w_core": w_core.astype(bf16),
        "b_core": params["b_core"].astype(f32).reshape(1, SHARED_DIM),
        "w_slab": w_slab.astype(bf16),
        "b_slab": b_slab,
        "w_out": w_out_lane.astype(bf16),
        "b_out": b_out,
    }


# ---------------------------------------------------------------------------
# Wrapper: flatten + single bf16 cast + single pad + gridded pallas_call.
# ---------------------------------------------------------------------------
@jax.jit
def neurodyn_expert_forward(features, packed):
    """Equivalent of NeuroDynExpert.forward(features) -> outputs['output']."""
    batch = features.shape[0]
    x = features.reshape(batch, -1).astype(jnp.bfloat16)      # one cast pass
    d_in = x.shape[1]
    d_in_pad = packed["w_core"].shape[0]

    tb = _pick_batch_tile(batch)
    b_pad = _round_up(batch, tb)
    pad_b, pad_d = b_pad - batch, d_in_pad - d_in
    if pad_b or pad_d:
        x = jnp.pad(x, ((0, pad_b), (0, pad_d)))              # one combined pad

    grid = (b_pad // tb,)

    # VMEM budget: double-buffered x/out tiles + resident weight slabs (+2x slop),
    # clamped well under v7x's 64 MiB physical per-core VMEM.
    vmem_need = (
        2 * tb * d_in_pad * 2
        + 2 * 8 * tb * 4
        + 2 * d_in_pad * SHARED_DIM * 2
        + 2 * SHARED_DIM * N_SLAB * 2
        + 2 * (N_SLAB + SHARED_DIM + 8 * SHARED_DIM + 1) * 4
    )
    vmem_limit = int(min(max(2 * vmem_need, 8 << 20), 32 << 20))

    out = pl.pallas_call(
        neurodyn_expert_kernel,
        out_shape=jax.ShapeDtypeStruct((8, b_pad), jnp.float32),
        grid=grid,
        in_specs=[
            pl.BlockSpec((tb, d_in_pad), lambda i: (i, 0)),          # x tile
            pl.BlockSpec((d_in_pad, SHARED_DIM), lambda i: (0, 0)),  # w_core
            pl.BlockSpec((1, SHARED_DIM), lambda i: (0, 0)),         # b_core
            pl.BlockSpec((SHARED_DIM, N_SLAB), lambda i: (0, 0)),    # w_slab
            pl.BlockSpec((1, N_SLAB), lambda i: (0, 0)),             # b_slab
            pl.BlockSpec((8, SHARED_DIM), lambda i: (0, 0)),         # w_out
            pl.BlockSpec((1, 1), lambda i: (0, 0)),                  # b_out
        ],
        out_specs=pl.BlockSpec((8, tb), lambda i: (0, i)),
        compiler_params=pltpu.CompilerParams(
            dimension_semantics=("parallel",),
            vmem_limit_bytes=vmem_limit,
        ),
    )(
        x,
        packed["w_core"], packed["b_core"],
        packed["w_slab"], packed["b_slab"],
        packed["w_out"], packed["b_out"],
    )
    # Row 0 of the lane-major output holds one scalar per batch row.
    return out[0, :batch].reshape(batch, OUTPUT_DIM)


# ---------------------------------------------------------------------------
# Deterministic parameter initialization (PyTorch-Linear-style uniform).
# ---------------------------------------------------------------------------
def init_params(key, input_dim):
    ks = jax.random.split(key, 8)

    def uniform(k, shape, fan_in):
        bound = 1.0 / (fan_in ** 0.5)
        return jax.random.uniform(k, shape, jnp.float32, -bound, bound)

    return {
        "w_core": uniform(ks[0], (input_dim, SHARED_DIM), input_dim),
        "b_core": uniform(ks[1], (1, SHARED_DIM), input_dim),
        "w_mod":  uniform(ks[2], (NUM_MODULES, SHARED_DIM, SHARED_DIM), SHARED_DIM),
        "b_mod":  uniform(ks[3], (NUM_MODULES, 1, SHARED_DIM), SHARED_DIM),
        "w_gate": uniform(ks[4], (SHARED_DIM, NUM_MODULES), SHARED_DIM),
        "b_gate": uniform(ks[5], (1, NUM_MODULES), SHARED_DIM),
        "w_out":  uniform(ks[6], (SHARED_DIM, OUTPUT_DIM), SHARED_DIM),
        "b_out":  uniform(ks[7], (1, OUTPUT_DIM), SHARED_DIM),
    }


if __name__ == "__main__":
    key = jax.random.PRNGKey(0)
    k_x, k_p = jax.random.split(key)

    # NCHW image-like input, flattened inside the wrapper: input_dim = 4*16*16.
    x = jax.random.normal(k_x, (2, 4, 16, 16), dtype=jnp.float32)
    input_dim = 4 * 16 * 16

    params = init_params(k_p, input_dim)
    packed = pack_params(params)

    out = neurodyn_expert_forward(x, packed)
    out = jax.block_until_ready(out)

    assert out.shape == (2, OUTPUT_DIM), out.shape
    assert bool(jnp.all(jnp.isfinite(out)))
    print("KERNEL_OK")
</pallas_src>

<mosaic_0001>
module attributes {stable_mosaic.version = 11 : i64} {
  func.func @neurodyn_expert_kernel(%arg0: i32, %arg1: memref<8x1024xbf16, #tpu.memory_space<vmem>>, %arg2: memref<1024x128xbf16, #tpu.memory_space<vmem>>, %arg3: memref<1x128xf32, #tpu.memory_space<vmem>>, %arg4: memref<128x384xbf16, #tpu.memory_space<vmem>>, %arg5: memref<1x384xf32, #tpu.memory_space<vmem>>, %arg6: memref<8x128xbf16, #tpu.memory_space<vmem>>, %arg7: memref<1x1xf32, #tpu.memory_space<vmem>>, %arg8: memref<8x8xf32, #tpu.memory_space<vmem>>) attributes {dimension_semantics = [#tpu.dimension_semantics<parallel>], iteration_bounds = array<i64: 1>, scalar_prefetch = 0 : i64, scratch_operands = 0 : i64, tpu.core_type = #tpu.core_type<tc>, window_params = [{transform_indices = @transform_0, window_bounds = array<i64: 8, 1024>}, {pipeline_mode = #tpu.pipeline_mode<synchronous>, transform_indices = @transform_1, window_bounds = array<i64: 1024, 128>}, {pipeline_mode = #tpu.pipeline_mode<synchronous>, transform_indices = @transform_2, window_bounds = array<i64: 1, 128>}, {pipeline_mode = #tpu.pipeline_mode<synchronous>, transform_indices = @transform_3, window_bounds = array<i64: 128, 384>}, {pipeline_mode = #tpu.pipeline_mode<synchronous>, transform_indices = @transform_4, window_bounds = array<i64: 1, 384>}, {pipeline_mode = #tpu.pipeline_mode<synchronous>, transform_indices = @transform_5, window_bounds = array<i64: 8, 128>}, {pipeline_mode = #tpu.pipeline_mode<synchronous>, transform_indices = @transform_6, window_bounds = array<i64: 1, 1>}, {transform_indices = @transform_7, window_bounds = array<i64: 8, 8>}]} {
    %c0 = arith.constant 0 : index
    %c0_0 = arith.constant 0 : index
    %0 = vector.load %arg1[%c0, %c0_0] : memref<8x1024xbf16, #tpu.memory_space<vmem>>, vector<8x1024xbf16>
    %c0_1 = arith.constant 0 : index
    %c0_2 = arith.constant 0 : index
    %1 = vector.load %arg2[%c0_1, %c0_2] : memref<1024x128xbf16, #tpu.memory_space<vmem>>, vector<1024x128xbf16>
    %cst = arith.constant dense<0.000000e+00> : vector<8x128xf32>
    %2 = tpu.matmul %0, %1, %cst {dimension_numbers = #tpu.dot_dimension_numbers<[1], [0], [0], [1], [0, 0, 1, 1], [], []>} : vector<8x1024xbf16>, vector<1024x128xbf16>, vector<8x128xf32> -> vector<8x128xf32>
    %c0_3 = arith.constant 0 : index
    %c0_4 = arith.constant 0 : index
    %3 = vector.load %arg3[%c0_3, %c0_4] : memref<1x128xf32, #tpu.memory_space<vmem>>, vector<1x128xf32>
    %4 = vector.broadcast %3 : vector<1x128xf32> to vector<8x128xf32>
    %5 = arith.addf %2, %4 : vector<8x128xf32>
    %6 = math.tanh %5 : vector<8x128xf32>
    %7 = arith.truncf %6 : vector<8x128xf32> to vector<8x128xbf16>
    %c0_5 = arith.constant 0 : index
    %c0_6 = arith.constant 0 : index
    %8 = vector.load %arg4[%c0_5, %c0_6] : memref<128x384xbf16, #tpu.memory_space<vmem>>, vector<128x384xbf16>
    %cst_7 = arith.constant dense<0.000000e+00> : vector<8x384xf32>
    %9 = tpu.matmul %7, %8, %cst_7 {dimension_numbers = #tpu.dot_dimension_numbers<[1], [0], [0], [1], [0, 0, 1, 1], [], []>} : vector<8x128xbf16>, vector<128x384xbf16>, vector<8x384xf32> -> vector<8x384xf32>
    %c0_8 = arith.constant 0 : index
    %c0_9 = arith.constant 0 : index
    %10 = vector.load %arg5[%c0_8, %c0_9] : memref<1x384xf32, #tpu.memory_space<vmem>>, vector<1x384xf32>
    %11 = vector.broadcast %10 : vector<1x384xf32> to vector<8x384xf32>
    %12 = arith.addf %9, %11 : vector<8x384xf32>
    %13 = vector.extract_strided_slice %12 {offsets = [0, 256], sizes = [8, 1], strides = [1, 1]} : vector<8x384xf32> to vector<8x1xf32>
    %cst_10 = arith.constant 5.000000e-01 : f32
    %14 = vector.broadcast %cst_10 : f32 to vector<8x1xf32>
    %15 = arith.mulf %14, %13 : vector<8x1xf32>
    %16 = math.tanh %15 : vector<8x1xf32>
    %cst_11 = arith.constant 1.000000e+00 : f32
    %17 = vector.broadcast %cst_11 : f32 to vector<8x1xf32>
    %18 = arith.addf %16, %17 : vector<8x1xf32>
    %cst_12 = arith.constant 5.000000e-01 : f32
    %19 = vector.broadcast %cst_12 : f32 to vector<8x1xf32>
    %20 = arith.mulf %19, %18 : vector<8x1xf32>
    %21 = vector.extract_strided_slice %12 {offsets = [0, 0], sizes = [8, 128], strides = [1, 1]} : vector<8x384xf32> to vector<8x128xf32>
    %cst_13 = arith.constant 0.000000e+00 : f32
    %22 = vector.broadcast %cst_13 : f32 to vector<8x128xf32>
    %23 = arith.maximumf %21, %22 : vector<8x128xf32>
    %24 = vector.broadcast %20 : vector<8x1xf32> to vector<8x128xf32>
    %25 = arith.mulf %24, %23 : vector<8x128xf32>
    %26 = arith.addf %6, %25 : vector<8x128xf32>
    %cst_14 = arith.constant 1.000000e+00 : f32
    %27 = vector.broadcast %cst_14 : f32 to vector<8x1xf32>
    %28 = arith.subf %27, %20 : vector<8x1xf32>
    %29 = vector.extract_strided_slice %12 {offsets = [0, 128], sizes = [8, 128], strides = [1, 1]} : vector<8x384xf32> to vector<8x128xf32>
    %cst_15 = arith.constant 0.000000e+00 : f32
    %30 = vector.broadcast %cst_15 : f32 to vector<8x128xf32>
    %31 = arith.maximumf %29, %30 : vector<8x128xf32>
    %32 = vector.broadcast %28 : vector<8x1xf32> to vector<8x128xf32>
    %33 = arith.mulf %32, %31 : vector<8x128xf32>
    %34 = arith.addf %26, %33 : vector<8x128xf32>
    %c0_16 = arith.constant 0 : index
    %c0_17 = arith.constant 0 : index
    %35 = vector.load %arg6[%c0_16, %c0_17] : memref<8x128xbf16, #tpu.memory_space<vmem>>, vector<8x128xbf16>
    %36 = arith.truncf %34 : vector<8x128xf32> to vector<8x128xbf16>
    %cst_18 = arith.constant dense<0.000000e+00> : vector<8x8xf32>
    %37 = tpu.matmul %35, %36, %cst_18 {dimension_numbers = #tpu.dot_dimension_numbers<[1], [1], [0], [0], [0, 0, 1, 0], [], []>} : vector<8x128xbf16>, vector<8x128xbf16>, vector<8x8xf32> -> vector<8x8xf32>
    %c0_19 = arith.constant 0 : index
    %c0_20 = arith.constant 0 : index
    %38 = vector.load %arg7[%c0_19, %c0_20] : memref<1x1xf32, #tpu.memory_space<vmem>>, vector<1x1xf32>
    %39 = vector.broadcast %38 : vector<1x1xf32> to vector<8x8xf32>
    %40 = arith.addf %37, %39 : vector<8x8xf32>
    %c0_21 = arith.constant 0 : index
    %c0_22 = arith.constant 0 : index
    %41 = vector.load %arg8[%c0_21, %c0_22] : memref<8x8xf32, #tpu.memory_space<vmem>>, vector<8x8xf32>
    tpu.vector_store %arg8[%c0_21, %c0_22], %40 {strides = array<i32>} : memref<8x8xf32, #tpu.memory_space<vmem>>, vector<8x8xf32>,
    return
  }
  func.func @transform_0(%arg0: i32) -> (i32, i32) {
    %c0_i32 = arith.constant 0 : i32
    %c0_i32_0 = arith.constant 0 : i32
    return %arg0, %c0_i32 : i32, i32
  }
  func.func @transform_1(%arg0: i32) -> (i32, i32) {
    %c0_i32 = arith.constant 0 : i32
    %c0_i32_0 = arith.constant 0 : i32
    %c0_i32_1 = arith.constant 0 : i32
    return %c0_i32, %c0_i32_0 : i32, i32
  }
  func.func @transform_2(%arg0: i32) -> (i32, i32) {
    %c0_i32 = arith.constant 0 : i32
    %c0_i32_0 = arith.constant 0 : i32
    %c0_i32_1 = arith.constant 0 : i32
    return %c0_i32, %c0_i32_0 : i32, i32
  }
  func.func @transform_3(%arg0: i32) -> (i32, i32) {
    %c0_i32 = arith.constant 0 : i32
    %c0_i32_0 = arith.constant 0 : i32
    %c0_i32_1 = arith.constant 0 : i32
    return %c0_i32, %c0_i32_0 : i32, i32
  }
  func.func @transform_4(%arg0: i32) -> (i32, i32) {
    %c0_i32 = arith.constant 0 : i32
    %c0_i32_0 = arith.constant 0 : i32
    %c0_i32_1 = arith.constant 0 : i32
    return %c0_i32, %c0_i32_0 : i32, i32
  }
  func.func @transform_5(%arg0: i32) -> (i32, i32) {
    %c0_i32 = arith.constant 0 : i32
    %c0_i32_0 = arith.constant 0 : i32
    %c0_i32_1 = arith.constant 0 : i32
    return %c0_i32, %c0_i32_0 : i32, i32
  }
  func.func @transform_6(%arg0: i32) -> (i32, i32) {
    %c0_i32 = arith.constant 0 : i32
    %c0_i32_0 = arith.constant 0 : i32
    %c0_i32_1 = arith.constant 0 : i32
    return %c0_i32, %c0_i32_0 : i32, i32
  }
  func.func @transform_7(%arg0: i32) -> (i32, i32) {
    %c0_i32 = arith.constant 0 : i32
    %c0_i32_0 = arith.constant 0 : i32
    return %c0_i32, %arg0 : i32, i32
  }
}

</mosaic_0001>

<llo_original>
// kernel: neurodyn_expert_forward.1
$region0: #{neurodyn_expert_forward.1}
  #allocation0 [shape = 'u32[]', space=smem, size = 0x4, offset = 0x4, fixed_abs, tag = 'smem constant byte address 0x4 - core index']
  #allocation1 [shape = 'u32[144,128]{1,0:T(1,128)}', space=vmem, size = 0x12000, scoped, tag = 'internal scratch']
  #allocation2 [shape = 'f32[1,1]{1,0:T(1,128)S(1)}', space=vmem, size = 0x200, scoped, tag = 'scoped memory for neurodyn_expert_forward.1']
  %s0 = inlined_call_operand.vmem [shape: bf16[8,1024], index: 0, kind: input, shape index: {}]
  %s1 = inlined_call_operand.hbm [shape: bf16[1024,128], index: 1, kind: input, shape index: {}]
  %s2 = inlined_call_operand.vmem [shape: f32[1,128], index: 2, kind: input, shape index: {}]
  %s3 = inlined_call_operand.vmem [shape: bf16[128,384], index: 3, kind: input, shape index: {}]
  %s4 = inlined_call_operand.vmem [shape: f32[1,384], index: 4, kind: input, shape index: {}]
  %s5 = inlined_call_operand.vmem [shape: bf16[8,128], index: 5, kind: input, shape index: {}]
  %s6 = inlined_call_operand.<no memory space> [shape: f32[1,1], index: 6, kind: input, shape index: {}]
  %s7 = inlined_call_operand.vmem [shape: f32[8,8], index: 7, kind: output, shape index: {}]
  %s8 = sld [smem:[#allocation0]]
  $region42: #{neurodyn_expert_forward.1} parent=0
    _
  %s10 = ssub.s32 1, %s8
  %s11 = scalar_select 0, %s10, %s8
  %v12 = vstv %s6
  %13 = vst [vmem:[#allocation2] sm:$0x1] %v12
  $region1: #{neurodyn_expert_forward.1} parent=0
    #allocation3 [shape = 'u8[262144]{0}', space=vmem, size = 0x40000, scoped, tag = 'input window, operand 1, single buffered']
    #allocation4 [shape = 's32[1]{0}', space=sflag, size = 0x4, scoped, tag = 'scoped memory for neurodyn_expert_forward.1']
    %14 = vsyncpa [#allocation4], 0
    // Predicated region
    $region2: #{neurodyn_expert_forward.1} parent=1 // pred_check
      _
    $region3: #{neurodyn_expert_forward.1} parent=1 // pred_check_branch
      %16 = sbr.rel (0) target = $region5
    $region4: #{neurodyn_expert_forward.1} parent=1 // pred_region
      _
    $region5: #{neurodyn_expert_forward.1} parent=1 // pred_fallthru
      _
    // Predicated region
    $region6: #{neurodyn_expert_forward.1} parent=1 // pred_check
      _
    $region7: #{neurodyn_expert_forward.1} parent=1 // pred_check_branch
      %18 = sbr.rel (0) target = $region9
    $region8: #{neurodyn_expert_forward.1} parent=1 // pred_region
      %s20 = ssub.s32 8192, 8192
      %21 = vsyncadd [#allocation4], %s20
      %s22 = sshll.u32 [#allocation3], 4
      %s23 = int_to_ptr.vmem [resolvable:$true] %s22
      %28 = dma.hbm_to_vmem [thread:$0]  %s1, 8192, %s23, [#allocation4], 64, 64, 4
    $region9: #{neurodyn_expert_forward.1} parent=1 // pred_fallthru
      _
    // Predicated region
    $region10: #{neurodyn_expert_forward.1} parent=1 // pred_check
      _
    $region11: #{neurodyn_expert_forward.1} parent=1 // pred_check_branch
      %30 = sbr.rel (0) target = $region13
    $region12: #{neurodyn_expert_forward.1} parent=1 // pred_region
      _
    $region13: #{neurodyn_expert_forward.1} parent=1 // pred_fallthru
      _
    // Predicated region
    $region14: #{neurodyn_expert_forward.1} parent=1 // pred_check
      _
    $region15: #{neurodyn_expert_forward.1} parent=1 // pred_check_branch
      %32 = sbr.rel (0) target = $region17
    $region16: #{neurodyn_expert_forward.1} parent=1 // pred_region
      _
    $region17: #{neurodyn_expert_forward.1} parent=1 // pred_fallthru
      _
    // Predicated region
    $region18: #{neurodyn_expert_forward.1} parent=1 // pred_check
      _
    $region19: #{neurodyn_expert_forward.1} parent=1 // pred_check_branch
      %34 = sbr.rel (0) target = $region21
    $region20: #{neurodyn_expert_forward.1} parent=1 // pred_region
      _
    $region21: #{neurodyn_expert_forward.1} parent=1 // pred_fallthru
      _
    // Predicated region
    $region22: #{neurodyn_expert_forward.1} parent=1 // pred_check
      _
    $region23: #{neurodyn_expert_forward.1} parent=1 // pred_check_branch
      %36 = sbr.rel (0) target = $region25
    $region24: #{neurodyn_expert_forward.1} parent=1 // pred_region
      _
    $region25: #{neurodyn_expert_forward.1} parent=1 // pred_fallthru
      _
    // Predicated region
    $region26: #{neurodyn_expert_forward.1} parent=1 // pred_check
      _
    $region27: #{neurodyn_expert_forward.1} parent=1 // pred_check_branch
      %38 = sbr.rel (0) target = $region29
    $region28: #{neurodyn_expert_forward.1} parent=1 // pred_region
      _
    $region29: #{neurodyn_expert_forward.1} parent=1 // pred_fallthru
      _
    // Predicated region
    $region30: #{neurodyn_expert_forward.1} parent=1 // pred_check
      _
    $region31: #{neurodyn_expert_forward.1} parent=1 // pred_check_branch
      %40 = sbr.rel (0) target = $region33
    $region32: #{neurodyn_expert_forward.1} parent=1 // pred_region
      %41 = dma.done [#allocation4], 8192
    $region33: #{neurodyn_expert_forward.1} parent=1 // pred_fallthru
      _
    %v43 = vld [vmem:[%s0] sm:$0xff]
    %v44 = vld [vmem:[%s0 + $0x8] sm:$0xff]
    %v45 = vld [vmem:[%s0 + $0x10] sm:$0xff]
    %v46 = vld [vmem:[%s0 + $0x18] sm:$0xff]
    %v47 = vld [vmem:[#allocation3] sm:$0xf]
    %v48 = vld [vmem:[#allocation3 + $0x4] sm:$0xf]
    %v49 = vld [vmem:[#allocation3 + $0x8] sm:$0xf]
    %v50 = vld [vmem:[#allocation3 + $0xc] sm:$0xf]
    %v51 = vld [vmem:[#allocation3 + $0x10] sm:$0xf]
    %v52 = vld [vmem:[#allocation3 + $0x14] sm:$0xf]
    %v53 = vld [vmem:[#allocation3 + $0x18] sm:$0xf]
    %v54 = vld [vmem:[#allocation3 + $0x1c] sm:$0xf]
    %v55 = vld [vmem:[#allocation3 + $0x20] sm:$0xf]
    %v56 = vld [vmem:[#allocation3 + $0x24] sm:$0xf]
    %v57 = vld [vmem:[#allocation3 + $0x28] sm:$0xf]
    %v58 = vld [vmem:[#allocation3 + $0x2c] sm:$0xf]
    %v59 = vld [vmem:[#allocation3 + $0x30] sm:$0xf]
    %v60 = vld [vmem:[#allocation3 + $0x34] sm:$0xf]
    %v61 = vld [vmem:[#allocation3 + $0x38] sm:$0xf]
    %v62 = vld [vmem:[#allocation3 + $0x3c] sm:$0xf]
    %v63 = vld [vmem:[#allocation3 + $0x40] sm:$0xf]
    %v64 = vld [vmem:[#allocation3 + $0x44] sm:$0xf]
    %v65 = vld [vmem:[#allocation3 + $0x48] sm:$0xf]
    %v66 = vld [vmem:[#allocation3 + $0x4c] sm:$0xf]
    %v67 = vld [vmem:[#allocation3 + $0x50] sm:$0xf]
    %v68 = vld [vmem:[#allocation3 + $0x54] sm:$0xf]
    %v69 = vld [vmem:[#allocation3 + $0x58] sm:$0xf]
    %v70 = vld [vmem:[#allocation3 + $0x5c] sm:$0xf]
    %v71 = vld [vmem:[#allocation3 + $0x60] sm:$0xf]
    %v72 = vld [vmem:[#allocation3 + $0x64] sm:$0xf]
    %v73 = vld [vmem:[#allocation3 + $0x68] sm:$0xf]
    %v74 = vld [vmem:[#allocation3 + $0x6c] sm:$0xf]
    %v75 = vld [vmem:[#allocation3 + $0x70] sm:$0xf]
    %v76 = vld [vmem:[#allocation3 + $0x74] sm:$0xf]
    %v77 = vld [vmem:[#allocation3 + $0x78] sm:$0xf]
    %v78 = vld [vmem:[#allocation3 + $0x7c] sm:$0xf]
    %v79 = vld [vmem:[#allocation3 + $0x80] sm:$0xf]
    %v80 = vld [vmem:[#allocation3 + $0x84] sm:$0xf]
    %v81 = vld [vmem:[#allocation3 + $0x88] sm:$0xf]
    %v82 = vld [vmem:[#allocation3 + $0x8c] sm:$0xf]
    %v83 = vld [vmem:[#allocation3 + $0x90] sm:$0xf]
    %v84 = vld [vmem:[#allocation3 + $0x94] sm:$0xf]
    %v85 = vld [vmem:[#allocation3 + $0x98] sm:$0xf]
    %v86 = vld [vmem:[#allocation3 + $0x9c] sm:$0xf]
    %v87 = vld [vmem:[#allocation3 + $0xa0] sm:$0xf]
    %v88 = vld [vmem:[#allocation3 + $0xa4] sm:$0xf]
    %v89 = vld [vmem:[#allocation3 + $0xa8] sm:$0xf]
    %v90 = vld [vmem:[#allocation3 + $0xac] sm:$0xf]
    %v91 = vld [vmem:[#allocation3 + $0xb0] sm:$0xf]
    %v92 = vld [vmem:[#allocation3 + $0xb4] sm:$0xf]
    %v93 = vld [vmem:[#allocation3 + $0xb8] sm:$0xf]
    %v94 = vld [vmem:[#allocation3 + $0xbc] sm:$0xf]
    %v95 = vld [vmem:[#allocation3 + $0xc0] sm:$0xf]
    %v96 = vld [vmem:[#allocation3 + $0xc4] sm:$0xf]
    %v97 = vld [vmem:[#allocation3 + $0xc8] sm:$0xf]
    %v98 = vld [vmem:[#allocation3 + $0xcc] sm:$0xf]
    %v99 = vld [vmem:[#allocation3 + $0xd0] sm:$0xf]
    %v100 = vld [vmem:[#allocation3 + $0xd4] sm:$0xf]
    %v101 = vld [vmem:[#allocation3 + $0xd8] sm:$0xf]
    %v102 = vld [vmem:[#allocation3 + $0xdc] sm:$0xf]
    %v103 = vld [vmem:[#allocation3 + $0xe0] sm:$0xf]
    %v104 = vld [vmem:[#allocation3 + $0xe4] sm:$0xf]
    %v105 = vld [vmem:[#allocation3 + $0xe8] sm:$0xf]
    %v106 = vld [vmem:[#allocation3 + $0xec] sm:$0xf]
    %v107 = vld [vmem:[#allocation3 + $0xf0] sm:$0xf]
    %v108 = vld [vmem:[#allocation3 + $0xf4] sm:$0xf]
    %v109 = vld [vmem:[#allocation3 + $0xf8] sm:$0xf]
    %v110 = vld [vmem:[#allocation3 + $0xfc] sm:$0xf]
    %v111 = vld [vmem:[#allocation3 + $0x100] sm:$0xf]
    %v112 = vld [vmem:[#allocation3 + $0x104] sm:$0xf]
    %v113 = vld [vmem:[#allocation3 + $0x108] sm:$0xf]
    %v114 = vld [vmem:[#allocation3 + $0x10c] sm:$0xf]
    %v115 = vld [vmem:[#allocation3 + $0x110] sm:$0xf]
    %v116 = vld [vmem:[#allocation3 + $0x114] sm:$0xf]
    %v117 = vld [vmem:[#allocation3 + $0x118] sm:$0xf]
    %v118 = vld [vmem:[#allocation3 + $0x11c] sm:$0xf]
    %v119 = vld [vmem:[#allocation3 + $0x120] sm:$0xf]
    %v120 = vld [vmem:[#allocation3 + $0x124] sm:$0xf]
    %v121 = vld [vmem:[#allocation3 + $0x128] sm:$0xf]
    %v122 = vld [vmem:[#allocation3 + $0x12c] sm:$0xf]
    %v123 = vld [vmem:[#allocation3 + $0x130] sm:$0xf]
    %v124 = vld [vmem:[#allocation3 + $0x134] sm:$0xf]
    %v125 = vld [vmem:[#allocation3 + $0x138] sm:$0xf]
    %v126 = vld [vmem:[#allocation3 + $0x13c] sm:$0xf]
    %v127 = vld [vmem:[#allocation3 + $0x140] sm:$0xf]
    %v128 = vld [vmem:[#allocation3 + $0x144] sm:$0xf]
    %v129 = vld [vmem:[#allocation3 + $0x148] sm:$0xf]
    %v130 = vld [vmem:[#allocation3 + $0x14c] sm:$0xf]
    %v131 = vld [vmem:[#allocation3 + $0x150] sm:$0xf]
    %v132 = vld [vmem:[#allocation3 + $0x154] sm:$0xf]
    %v133 = vld [vmem:[#allocation3 + $0x158] sm:$0xf]
    %v134 = vld [vmem:[#allocation3 + $0x15c] sm:$0xf]
    %v135 = vld [vmem:[#allocation3 + $0x160] sm:$0xf]
    %v136 = vld [vmem:[#allocation3 + $0x164] sm:$0xf]
    %v137 = vld [vmem:[#allocation3 + $0x168] sm:$0xf]
    %v138 = vld [vmem:[#allocation3 + $0x16c] sm:$0xf]
    %v139 = vld [vmem:[#allocation3 + $0x170] sm:$0xf]
    %v140 = vld [vmem:[#allocation3 + $0x174] sm:$0xf]
    %v141 = vld [vmem:[#allocation3 + $0x178] sm:$0xf]
    %v142 = vld [vmem:[#allocation3 + $0x17c] sm:$0xf]
    %v143 = vld [vmem:[#allocation3 + $0x180] sm:$0xf]
    %v144 = vld [vmem:[#allocation3 + $0x184] sm:$0xf]
    %v145 = vld [vmem:[#allocation3 + $0x188] sm:$0xf]
    %v146 = vld [vmem:[#allocation3 + $0x18c] sm:$0xf]
    %v147 = vld [vmem:[#allocation3 + $0x190] sm:$0xf]
    %v148 = vld [vmem:[#allocation3 + $0x194] sm:$0xf]
    %v149 = vld [vmem:[#allocation3 + $0x198] sm:$0xf]
    %v150 = vld [vmem:[#allocation3 + $0x19c] sm:$0xf]
    %v151 = vld [vmem:[#allocation3 + $0x1a0] sm:$0xf]
    %v152 = vld [vmem:[#allocation3 + $0x1a4] sm:$0xf]
    %v153 = vld [vmem:[#allocation3 + $0x1a8] sm:$0xf]
    %v154 = vld [vmem:[#allocation3 + $0x1ac] sm:$0xf]
    %v155 = vld [vmem:[#allocation3 + $0x1b0] sm:$0xf]
    %v156 = vld [vmem:[#allocation3 + $0x1b4] sm:$0xf]
    %v157 = vld [vmem:[#allocation3 + $0x1b8] sm:$0xf]
    %v158 = vld [vmem:[#allocation3 + $0x1bc] sm:$0xf]
    %v159 = vld [vmem:[#allocation3 + $0x1c0] sm:$0xf]
    %v160 = vld [vmem:[#allocation3 + $0x1c4] sm:$0xf]
    %v161 = vld [vmem:[#allocation3 + $0x1c8] sm:$0xf]
    %v162 = vld [vmem:[#allocation3 + $0x1cc] sm:$0xf]
    %v163 = vld [vmem:[#allocation3 + $0x1d0] sm:$0xf]
    %v164 = vld [vmem:[#allocation3 + $0x1d4] sm:$0xf]
    %v165 = vld [vmem:[#allocation3 + $0x1d8] sm:$0xf]
    %v166 = vld [vmem:[#allocation3 + $0x1dc] sm:$0xf]
    %v167 = vld [vmem:[#allocation3 + $0x1e0] sm:$0xf]
    %v168 = vld [vmem:[#allocation3 + $0x1e4] sm:$0xf]
    %v169 = vld [vmem:[#allocation3 + $0x1e8] sm:$0xf]
    %v170 = vld [vmem:[#allocation3 + $0x1ec] sm:$0xf]
    %v171 = vld [vmem:[#allocation3 + $0x1f0] sm:$0xf]
    %v172 = vld [vmem:[#allocation3 + $0x1f4] sm:$0xf]
    %v173 = vld [vmem:[#allocation3 + $0x1f8] sm:$0xf]
    %v174 = vld [vmem:[#allocation3 + $0x1fc] sm:$0xf]
    %v175 = vld [vmem:[%s2] sm:$0x1]
    %v177 = vlaneseq
    %v178 = vshrl.u32 %v177, 7
    %v179 = vsub.s32 0, %v178
    %v180 = vrot.slane %v175, %v179
    %v186 = vunpack.c.l.b16 %v43
    %v187 = vunpack.c.h.b16 %v43
    %v188 = vunpack.c.l.b16 %v44
    %v189 = vunpack.c.h.b16 %v44
    %v190 = vunpack.c.l.b16 %v45
    %v191 = vunpack.c.h.b16 %v45
    %v192 = vunpack.c.l.b16 %v46
    %v193 = vunpack.c.h.b16 %v46
    %v194 = vpack.c.b16 %v186, %v186
    %v195 = vpack.c.b16 %v187, %v187
    %v196 = vpack.c.b16 %v188, %v188
    %v197 = vpack.c.b16 %v189, %v189
    %v198 = vpack.c.b16 %v190, %v190
    %v199 = vpack.c.b16 %v191, %v191
    %v200 = vpack.c.b16 %v192, %v192
    %v201 = vpack.c.b16 %v193, %v193
    %v338 = vunpack.c.l.b16 %v47
    %v339 = vunpack.c.l.b16 %v48
    %v340 = vunpack.c.l.b16 %v49
    %v341 = vunpack.c.l.b16 %v50
    %v342 = vunpack.c.l.b16 %v51
    %v343 = vunpack.c.l.b16 %v52
    %v344 = vunpack.c.l.b16 %v53
    %v345 = vunpack.c.l.b16 %v54
    %v346 = vunpack.c.l.b16 %v55
    %v347 = vunpack.c.l.b16 %v56
    %v348 = vunpack.c.l.b16 %v57
    %v349 = vunpack.c.l.b16 %v58
    %v350 = vunpack.c.l.b16 %v59
    %v351 = vunpack.c.l.b16 %v60
    %v352 = vunpack.c.l.b16 %v61
    %v353 = vunpack.c.l.b16 %v62
    %v354 = vunpack.c.l.b16 %v63
    %v355 = vunpack.c.l.b16 %v64
    %v356 = vunpack.c.l.b16 %v65
    %v357 = vunpack.c.l.b16 %v66
    %v358 = vunpack.c.l.b16 %v67
    %v359 = vunpack.c.l.b16 %v68
    %v360 = vunpack.c.l.b16 %v69
    %v361 = vunpack.c.l.b16 %v70
    %v362 = vunpack.c.l.b16 %v71
    %v363 = vunpack.c.l.b16 %v72
    %v364 = vunpack.c.l.b16 %v73
    %v365 = vunpack.c.l.b16 %v74
    %v366 = vunpack.c.l.b16 %v75
    %v367 = vunpack.c.l.b16 %v76
    %v368 = vunpack.c.l.b16 %v77
    %v369 = vunpack.c.l.b16 %v78
    %v370 = vunpack.c.l.b16 %v79
    %v371 = vunpack.c.l.b16 %v80
    %v372 = vunpack.c.l.b16 %v81
    %v373 = vunpack.c.l.b16 %v82
    %v374 = vunpack.c.l.b16 %v83
    %v375 = vunpack.c.l.b16 %v84
    %v376 = vunpack.c.l.b16 %v85
    %v377 = vunpack.c.l.b16 %v86
    %v378 = vunpack.c.l.b16 %v87
    %v379 = vunpack.c.l.b16 %v88
    %v380 = vunpack.c.l.b16 %v89
    %v381 = vunpack.c.l.b16 %v90
    %v382 = vunpack.c.l.b16 %v91
    %v383 = vunpack.c.l.b16 %v92
    %v384 = vunpack.c.l.b16 %v93
    %v385 = vunpack.c.l.b16 %v94
    %v386 = vunpack.c.l.b16 %v95
    %v387 = vunpack.c.l.b16 %v96
    %v388 = vunpack.c.l.b16 %v97
    %v389 = vunpack.c.l.b16 %v98
    %v390 = vunpack.c.l.b16 %v99
    %v391 = vunpack.c.l.b16 %v100
    %v392 = vunpack.c.l.b16 %v101
    %v393 = vunpack.c.l.b16 %v102
    %v394 = vunpack.c.l.b16 %v103
    %v395 = vunpack.c.l.b16 %v104
    %v396 = vunpack.c.l.b16 %v105
    %v397 = vunpack.c.l.b16 %v106
    %v398 = vunpack.c.l.b16 %v107
    %v399 = vunpack.c.l.b16 %v108
    %v400 = vunpack.c.l.b16 %v109
    %v401 = vunpack.c.l.b16 %v110
    %v402 = vunpack.c.l.b16 %v111
    %v403 = vunpack.c.l.b16 %v112
    %v404 = vunpack.c.l.b16 %v113
    %v405 = vunpack.c.l.b16 %v114
    %v406 = vunpack.c.l.b16 %v115
    %v407 = vunpack.c.l.b16 %v116
    %v408 = vunpack.c.l.b16 %v117
    %v409 = vunpack.c.l.b16 %v118
    %v410 = vunpack.c.l.b16 %v119
    %v411 = vunpack.c.l.b16 %v120
    %v412 = vunpack.c.l.b16 %v121
    %v413 = vunpack.c.l.b16 %v122
    %v414 = vunpack.c.l.b16 %v123
    %v415 = vunpack.c.l.b16 %v124
    %v416 = vunpack.c.l.b16 %v125
    %v417 = vunpack.c.l.b16 %v126
    %v418 = vunpack.c.l.b16 %v127
    %v419 = vunpack.c.l.b16 %v128
    %v420 = vunpack.c.l.b16 %v129
    %v421 = vunpack.c.l.b16 %v130
    %v422 = vunpack.c.l.b16 %v131
    %v423 = vunpack.c.l.b16 %v132
    %v424 = vunpack.c.l.b16 %v133
    %v425 = vunpack.c.l.b16 %v134
    %v426 = vunpack.c.l.b16 %v135
    %v427 = vunpack.c.l.b16 %v136
    %v428 = vunpack.c.l.b16 %v137
    %v429 = vunpack.c.l.b16 %v138
    %v430 = vunpack.c.l.b16 %v139
    %v431 = vunpack.c.l.b16 %v140
    %v432 = vunpack.c.l.b16 %v141
    %v433 = vunpack.c.l.b16 %v142
    %v434 = vunpack.c.l.b16 %v143
    %v435 = vunpack.c.l.b16 %v144
    %v436 = vunpack.c.l.b16 %v145
    %v437 = vunpack.c.l.b16 %v146
    %v438 = vunpack.c.l.b16 %v147
    %v439 = vunpack.c.l.b16 %v148
    %v440 = vunpack.c.l.b16 %v149
    %v441 = vunpack.c.l.b16 %v150
    %v442 = vunpack.c.l.b16 %v151
    %v443 = vunpack.c.l.b16 %v152
    %v444 = vunpack.c.l.b16 %v153
    %v445 = vunpack.c.l.b16 %v154
    %v446 = vunpack.c.l.b16 %v155
    %v447 = vunpack.c.l.b16 %v156
    %v448 = vunpack.c.l.b16 %v157
    %v449 = vunpack.c.l.b16 %v158
    %v450 = vunpack.c.l.b16 %v159
    %v451 = vunpack.c.l.b16 %v160
    %v452 = vunpack.c.l.b16 %v161
    %v453 = vunpack.c.l.b16 %v162
    %v454 = vunpack.c.l.b16 %v163
    %v455 = vunpack.c.l.b16 %v164
    %v456 = vunpack.c.l.b16 %v165
    %v457 = vunpack.c.l.b16 %v166
    %v458 = vunpack.c.l.b16 %v167
    %v459 = vunpack.c.l.b16 %v168
    %v460 = vunpack.c.l.b16 %v169
    %v461 = vunpack.c.l.b16 %v170
    %v462 = vunpack.c.l.b16 %v171
    %v463 = vunpack.c.l.b16 %v172
    %v464 = vunpack.c.l.b16 %v173
    %v465 = vunpack.c.l.b16 %v174
    %v466 = vpack.c.b16 %v339, %v338
    %v467 = vpack.c.b16 %v341, %v340
    %v468 = vpack.c.b16 %v343, %v342
    %v469 = vpack.c.b16 %v345, %v344
    %v470 = vpack.c.b16 %v347, %v346
    %v471 = vpack.c.b16 %v349, %v348
    %v472 = vpack.c.b16 %v351, %v350
    %v473 = vpack.c.b16 %v353, %v352
    %v474 = vpack.c.b16 %v355, %v354
    %v475 = vpack.c.b16 %v357, %v356
    %v476 = vpack.c.b16 %v359, %v358
    %v477 = vpack.c.b16 %v361, %v360
    %v478 = vpack.c.b16 %v363, %v362
    %v479 = vpack.c.b16 %v365, %v364
    %v480 = vpack.c.b16 %v367, %v366
    %v481 = vpack.c.b16 %v369, %v368
    %v482 = vpack.c.b16 %v371, %v370
    %v483 = vpack.c.b16 %v373, %v372
    %v484 = vpack.c.b16 %v375, %v374
    %v485 = vpack.c.b16 %v377, %v376
    %v486 = vpack.c.b16 %v379, %v378
    %v487 = vpack.c.b16 %v381, %v380
    %v488 = vpack.c.b16 %v383, %v382
    %v489 = vpack.c.b16 %v385, %v384
    %v490 = vpack.c.b16 %v387, %v386
    %v491 = vpack.c.b16 %v389, %v388
    %v492 = vpack.c.b16 %v391, %v390
    %v493 = vpack.c.b16 %v393, %v392
    %v494 = vpack.c.b16 %v395, %v394
    %v495 = vpack.c.b16 %v397, %v396
    %v496 = vpack.c.b16 %v399, %v398
    %v497 = vpack.c.b16 %v401, %v400
    %v498 = vpack.c.b16 %v403, %v402
    %v499 = vpack.c.b16 %v405, %v404
    %v500 = vpack.c.b16 %v407, %v406
    %v501 = vpack.c.b16 %v409, %v408
    %v502 = vpack.c.b16 %v411, %v410
    %v503 = vpack.c.b16 %v413, %v412
    %v504 = vpack.c.b16 %v415, %v414
    %v505 = vpack.c.b16 %v417, %v416
    %v506 = vpack.c.b16 %v419, %v418
    %v507 = vpack.c.b16 %v421, %v420
    %v508 = vpack.c.b16 %v423, %v422
    %v509 = vpack.c.b16 %v425, %v424
    %v510 = vpack.c.b16 %v427, %v426
    %v511 = vpack.c.b16 %v429, %v428
    %v512 = vpack.c.b16 %v431, %v430
    %v513 = vpack.c.b16 %v433, %v432
    %v514 = vpack.c.b16 %v435, %v434
    %v515 = vpack.c.b16 %v437, %v436
    %v516 = vpack.c.b16 %v439, %v438
    %v517 = vpack.c.b16 %v441, %v440
    %v518 = vpack.c.b16 %v443, %v442
    %v519 = vpack.c.b16 %v445, %v444
    %v520 = vpack.c.b16 %v447, %v446
    %v521 = vpack.c.b16 %v449, %v448
    %v522 = vpack.c.b16 %v451, %v450
    %v523 = vpack.c.b16 %v453, %v452
    %v524 = vpack.c.b16 %v455, %v454
    %v525 = vpack.c.b16 %v457, %v456
    %v526 = vpack.c.b16 %v459, %v458
    %v527 = vpack.c.b16 %v461, %v460
    %v528 = vpack.c.b16 %v463, %v462
    %v529 = vpack.c.b16 %v465, %v464
    %594 = vmatprep.subr.bf16.mxu0 0
    %595 = vmatpush1.bf16.msra.mxu0 %v466
    %596 = vmatprep.subr.bf16.mxu0 0
    %597 = vmatpush1.bf16.msra.mxu0 %v467
    %598 = vmatprep.subr.bf16.mxu0 0
    %599 = vmatpush1.bf16.msra.mxu0 %v468
    %600 = vmatprep.subr.bf16.mxu0 0
    %601 = vmatpush1.bf16.msra.mxu0 %v469
    %602 = vmatprep.subr.bf16.mxu0 0
    %603 = vmatpush1.bf16.msra.mxu0 %v470
    %604 = vmatprep.subr.bf16.mxu0 0
    %605 = vmatpush1.bf16.msra.mxu0 %v471
    %606 = vmatprep.subr.bf16.mxu0 0
    %607 = vmatpush1.bf16.msra.mxu0 %v472
    %608 = vmatprep.subr.bf16.mxu0 0
    %609 = vmatpush1.bf16.msra.mxu0 %v473
    %610 = vmatprep.subr.bf16.mxu0 0
    %611 = vmatpush1.bf16.msra.mxu0 %v474
    %612 = vmatprep.subr.bf16.mxu0 0
    %613 = vmatpush1.bf16.msra.mxu0 %v475
    %614 = vmatprep.subr.bf16.mxu0 0
    %615 = vmatpush1.bf16.msra.mxu0 %v476
    %616 = vmatprep.subr.bf16.mxu0 0
    %617 = vmatpush1.bf16.msra.mxu0 %v477
    %618 = vmatprep.subr.bf16.mxu0 0
    %619 = vmatpush1.bf16.msra.mxu0 %v478
    %620 = vmatprep.subr.bf16.mxu0 0
    %621 = vmatpush1.bf16.msra.mxu0 %v479
    %622 = vmatprep.subr.bf16.mxu0 0
    %623 = vmatpush1.bf16.msra.mxu0 %v480
    %624 = vmatprep.subr.bf16.mxu0 0
    %625 = vmatpush1.bf16.msra.mxu0 %v481
    %626 = vmatprep.mubr.bf16.mxu0 %v195
    %627 = vmatmul.mubr.bf16.gmra.mrb[0].mxu0 %v194
    %v628 = vpop.f32.mrb[0].mxu0
    %v629 = vadd.f32 %v180, %v628
    %v630 = vpop.f32.mrb[0].mxu0
    %v631 = vpop.f32.mrb[0].mxu0
    %v632 = vpop.f32.mrb[0].mxu0
    %633 = vdwg.mxu0
    %634 = vmatprep.subr.bf16.mxu0 0
    %635 = vmatpush1.bf16.msra.mxu0 %v482
    %636 = vmatprep.subr.bf16.mxu0 0
    %637 = vmatpush1.bf16.msra.mxu0 %v483
    %638 = vmatprep.subr.bf16.mxu0 0
    %639 = vmatpush1.bf16.msra.mxu0 %v484
    %640 = vmatprep.subr.bf16.mxu0 0
    %641 = vmatpush1.bf16.msra.mxu0 %v485
    %642 = vmatprep.subr.bf16.mxu0 0
    %643 = vmatpush1.bf16.msra.mxu0 %v486
    %644 = vmatprep.subr.bf16.mxu0 0
    %645 = vmatpush1.bf16.msra.mxu0 %v487
    %646 = vmatprep.subr.bf16.mxu0 0
    %647 = vmatpush1.bf16.msra.mxu0 %v488
    %648 = vmatprep.subr.bf16.mxu0 0
    %649 = vmatpush1.bf16.msra.mxu0 %v489
    %650 = vmatprep.subr.bf16.mxu0 0
    %651 = vmatpush1.bf16.msra.mxu0 %v490
    %652 = vmatprep.subr.bf16.mxu0 0
    %653 = vmatpush1.bf16.msra.mxu0 %v491
    %654 = vmatprep.subr.bf16.mxu0 0
    %655 = vmatpush1.bf16.msra.mxu0 %v492
    %656 = vmatprep.subr.bf16.mxu0 0
    %657 = vmatpush1.bf16.msra.mxu0 %v493
    %658 = vmatprep.subr.bf16.mxu0 0
    %659 = vmatpush1.bf16.msra.mxu0 %v494
    %660 = vmatprep.subr.bf16.mxu0 0
    %661 = vmatpush1.bf16.msra.mxu0 %v495
    %662 = vmatprep.subr.bf16.mxu0 0
    %663 = vmatpush1.bf16.msra.mxu0 %v496
    %664 = vmatprep.subr.bf16.mxu0 0
    %665 = vmatpush1.bf16.msra.mxu0 %v497
    %666 = vmatprep.mubr.bf16.mxu0 %v197
    %667 = vmatmul.mubr.bf16.gmra.mrb[0].mxu0 %v196
    %v668 = vpop.f32.mrb[0].mxu0
    %v669 = vadd.f32 %v629, %v668
    %v670 = vpop.f32.mrb[0].mxu0
    %v671 = vpop.f32.mrb[0].mxu0
    %v672 = vpop.f32.mrb[0].mxu0
    %673 = vdwg.mxu0
    %674 = vmatprep.subr.bf16.mxu0 0
    %675 = vmatpush1.bf16.msra.mxu0 %v498
    %676 = vmatprep.subr.bf16.mxu0 0
    %677 = vmatpush1.bf16.msra.mxu0 %v499
    %678 = vmatprep.subr.bf16.mxu0 0
    %679 = vmatpush1.bf16.msra.mxu0 %v500
    %680 = vmatprep.subr.bf16.mxu0 0
    %681 = vmatpush1.bf16.msra.mxu0 %v501
    %682 = vmatprep.subr.bf16.mxu0 0
    %683 = vmatpush1.bf16.msra.mxu0 %v502
    %684 = vmatprep.subr.bf16.mxu0 0
    %685 = vmatpush1.bf16.msra.mxu0 %v503
    %686 = vmatprep.subr.bf16.mxu0 0
    %687 = vmatpush1.bf16.msra.mxu0 %v504
    %688 = vmatprep.subr.bf16.mxu0 0
    %689 = vmatpush1.bf16.msra.mxu0 %v505
    %690 = vmatprep.subr.bf16.mxu0 0
    %691 = vmatpush1.bf16.msra.mxu0 %v506
    %692 = vmatprep.subr.bf16.mxu0 0
    %693 = vmatpush1.bf16.msra.mxu0 %v507
    %694 = vmatprep.subr.bf16.mxu0 0
    %695 = vmatpush1.bf16.msra.mxu0 %v508
    %696 = vmatprep.subr.bf16.mxu0 0
    %697 = vmatpush1.bf16.msra.mxu0 %v509
    %698 = vmatprep.subr.bf16.mxu0 0
    %699 = vmatpush1.bf16.msra.mxu0 %v510
    %700 = vmatprep.subr.bf16.mxu0 0
    %701 = vmatpush1.bf16.msra.mxu0 %v511
    %702 = vmatprep.subr.bf16.mxu0 0
    %703 = vmatpush1.bf16.msra.mxu0 %v512
    %704 = vmatprep.subr.bf16.mxu0 0
    %705 = vmatpush1.bf16.msra.mxu0 %v513
    %706 = vmatprep.mubr.bf16.mxu0 %v199
    %707 = vmatmul.mubr.bf16.gmra.mrb[0].mxu0 %v198
    %v708 = vpop.f32.mrb[0].mxu0
    %v709 = vadd.f32 %v669, %v708
    %v710 = vpop.f32.mrb[0].mxu0
    %v711 = vpop.f32.mrb[0].mxu0
    %v712 = vpop.f32.mrb[0].mxu0
    %713 = vdwg.mxu0
    %714 = vmatprep.subr.bf16.mxu0 0
    %715 = vmatpush1.bf16.msra.mxu0 %v514
    %716 = vmatprep.subr.bf16.mxu0 0
    %717 = vmatpush1.bf16.msra.mxu0 %v515
    %718 = vmatprep.subr.bf16.mxu0 0
    %719 = vmatpush1.bf16.msra.mxu0 %v516
    %720 = vmatprep.subr.bf16.mxu0 0
    %721 = vmatpush1.bf16.msra.mxu0 %v517
    %722 = vmatprep.subr.bf16.mxu0 0
    %723 = vmatpush1.bf16.msra.mxu0 %v518
    %724 = vmatprep.subr.bf16.mxu0 0
    %725 = vmatpush1.bf16.msra.mxu0 %v519
    %726 = vmatprep.subr.bf16.mxu0 0
    %727 = vmatpush1.bf16.msra.mxu0 %v520
    %728 = vmatprep.subr.bf16.mxu0 0
    %729 = vmatpush1.bf16.msra.mxu0 %v521
    %730 = vmatprep.subr.bf16.mxu0 0
    %731 = vmatpush1.bf16.msra.mxu0 %v522
    %732 = vmatprep.subr.bf16.mxu0 0
    %733 = vmatpush1.bf16.msra.mxu0 %v523
    %734 = vmatprep.subr.bf16.mxu0 0
    %735 = vmatpush1.bf16.msra.mxu0 %v524
    %736 = vmatprep.subr.bf16.mxu0 0
    %737 = vmatpush1.bf16.msra.mxu0 %v525
    %738 = vmatprep.subr.bf16.mxu0 0
    %739 = vmatpush1.bf16.msra.mxu0 %v526
    %740 = vmatprep.subr.bf16.mxu0 0
    %741 = vmatpush1.bf16.msra.mxu0 %v527
    %742 = vmatprep.subr.bf16.mxu0 0
    %743 = vmatpush1.bf16.msra.mxu0 %v528
    %744 = vmatprep.subr.bf16.mxu0 0
    %745 = vmatpush1.bf16.msra.mxu0 %v529
    %746 = vmatprep.mubr.bf16.mxu0 %v201
    %747 = vmatmul.mubr.bf16.gmra.mrb[0].mxu0 %v200
    %v748 = vpop.f32.mrb[0].mxu0
    %v749 = vadd.f32 %v709, %v748
    %v750 = vpop.f32.mrb[0].mxu0
    %v751 = vpop.f32.mrb[0].mxu0
    %v752 = vpop.f32.mrb[0].mxu0
    %753 = vdwg.mxu0
    %v754 = vtanh.pop %v749
    %v755 = vpack.c.bf16 %v754, %v754
    %v756 = vld [vmem:[%s3] sm:$0xff]
    %v757 = vld [vmem:[%s3 + $0x8] sm:$0xf]
    %v758 = vld [vmem:[%s3 + $0xc] sm:$0xff]
    %v759 = vld [vmem:[%s3 + $0x14] sm:$0xf]
    %v760 = vld [vmem:[%s3 + $0x18] sm:$0xff]
    %v761 = vld [vmem:[%s3 + $0x20] sm:$0xf]
    %v762 = vld [vmem:[%s3 + $0x24] sm:$0xff]
    %v763 = vld [vmem:[%s3 + $0x2c] sm:$0xf]
    %v764 = vld [vmem:[%s3 + $0x30] sm:$0xff]
    %v765 = vld [vmem:[%s3 + $0x38] sm:$0xf]
    %v766 = vld [vmem:[%s3 + $0x3c] sm:$0xff]
    %v767 = vld [vmem:[%s3 + $0x44] sm:$0xf]
    %v768 = vld [vmem:[%s3 + $0x48] sm:$0xff]
    %v769 = vld [vmem:[%s3 + $0x50] sm:$0xf]
    %v770 = vld [vmem:[%s3 + $0x54] sm:$0xff]
    %v771 = vld [vmem:[%s3 + $0x5c] sm:$0xf]
    %v772 = vld [vmem:[%s3 + $0x60] sm:$0xff]
    %v773 = vld [vmem:[%s3 + $0x68] sm:$0xf]
    %v774 = vld [vmem:[%s3 + $0x6c] sm:$0xff]
    %v775 = vld [vmem:[%s3 + $0x74] sm:$0xf]
    %v776 = vld [vmem:[%s3 + $0x78] sm:$0xff]
    %v777 = vld [vmem:[%s3 + $0x80] sm:$0xf]
    %v778 = vld [vmem:[%s3 + $0x84] sm:$0xff]
    %v779 = vld [vmem:[%s3 + $0x8c] sm:$0xf]
    %v780 = vld [vmem:[%s3 + $0x90] sm:$0xff]
    %v781 = vld [vmem:[%s3 + $0x98] sm:$0xf]
    %v782 = vld [vmem:[%s3 + $0x9c] sm:$0xff]
    %v783 = vld [vmem:[%s3 + $0xa4] sm:$0xf]
    %v784 = vld [vmem:[%s3 + $0xa8] sm:$0xff]
    %v785 = vld [vmem:[%s3 + $0xb0] sm:$0xf]
    %v786 = vld [vmem:[%s3 + $0xb4] sm:$0xff]
    %v787 = vld [vmem:[%s3 + $0xbc] sm:$0xf]
    %v788 = vld [vmem:[%s4] sm:$0x7]
    %v790 = vlaneseq
    %v791 = vshrl.u32 %v790, 7
    %v792 = vsub.s32 0, %v791
    %v793 = vrot.slane %v788, %v792
    %v794 = vlaneseq
    %v795 = vshrl.u32 %v794, 7
    %v796 = vsub.s32 1, %v795
    %v797 = vrot.slane %v788, %v796
    %v798 = vlaneseq
    %v799 = vshrl.u32 %v798, 7
    %v800 = vsub.s32 2, %v799
    %v801 = vrot.slane %v788, %v800
    %v837 = vunpack.c.l.b16 %v756
    %v838 = vunpack.c.h.b16 %v756
    %v839 = vunpack.c.l.b16 %v757
    %v840 = vunpack.c.l.b16 %v758
    %v841 = vunpack.c.h.b16 %v758
    %v842 = vunpack.c.l.b16 %v759
    %v843 = vunpack.c.l.b16 %v760
    %v844 = vunpack.c.h.b16 %v760
    %v845 = vunpack.c.l.b16 %v761
    %v846 = vunpack.c.l.b16 %v762
    %v847 = vunpack.c.h.b16 %v762
    %v848 = vunpack.c.l.b16 %v763
    %v849 = vunpack.c.l.b16 %v764
    %v850 = vunpack.c.h.b16 %v764
    %v851 = vunpack.c.l.b16 %v765
    %v852 = vunpack.c.l.b16 %v766
    %v853 = vunpack.c.h.b16 %v766
    %v854 = vunpack.c.l.b16 %v767
    %v855 = vunpack.c.l.b16 %v768
    %v856 = vunpack.c.h.b16 %v768
    %v857 = vunpack.c.l.b16 %v769
    %v858 = vunpack.c.l.b16 %v770
    %v859 = vunpack.c.h.b16 %v770
    %v860 = vunpack.c.l.b16 %v771
    %v861 = vunpack.c.l.b16 %v772
    %v862 = vunpack.c.h.b16 %v772
    %v863 = vunpack.c.l.b16 %v773
    %v864 = vunpack.c.l.b16 %v774
    %v865 = vunpack.c.h.b16 %v774
    %v866 = vunpack.c.l.b16 %v775
    %v867 = vunpack.c.l.b16 %v776
    %v868 = vunpack.c.h.b16 %v776
    %v869 = vunpack.c.l.b16 %v777
    %v870 = vunpack.c.l.b16 %v778
    %v871 = vunpack.c.h.b16 %v778
    %v872 = vunpack.c.l.b16 %v779
    %v873 = vunpack.c.l.b16 %v780
    %v874 = vunpack.c.h.b16 %v780
    %v875 = vunpack.c.l.b16 %v781
    %v876 = vunpack.c.l.b16 %v782
    %v877 = vunpack.c.h.b16 %v782
    %v878 = vunpack.c.l.b16 %v783
    %v879 = vunpack.c.l.b16 %v784
    %v880 = vunpack.c.h.b16 %v784
    %v881 = vunpack.c.l.b16 %v785
    %v882 = vunpack.c.l.b16 %v786
    %v883 = vunpack.c.h.b16 %v786
    %v884 = vunpack.c.l.b16 %v787
    %v885 = vpack.c.b16 %v840, %v837
    %v886 = vpack.c.b16 %v841, %v838
    %v887 = vpack.c.b16 %v842, %v839
    %v888 = vpack.c.b16 %v846, %v843
    %v889 = vpack.c.b16 %v847, %v844
    %v890 = vpack.c.b16 %v848, %v845
    %v891 = vpack.c.b16 %v852, %v849
    %v892 = vpack.c.b16 %v853, %v850
    %v893 = vpack.c.b16 %v854, %v851
    %v894 = vpack.c.b16 %v858, %v855
    %v895 = vpack.c.b16 %v859, %v856
    %v896 = vpack.c.b16 %v860, %v857
    %v897 = vpack.c.b16 %v864, %v861
    %v898 = vpack.c.b16 %v865, %v862
    %v899 = vpack.c.b16 %v866, %v863
    %v900 = vpack.c.b16 %v870, %v867
    %v901 = vpack.c.b16 %v871, %v868
    %v902 = vpack.c.b16 %v872, %v869
    %v903 = vpack.c.b16 %v876, %v873
    %v904 = vpack.c.b16 %v877, %v874
    %v905 = vpack.c.b16 %v878, %v875
    %v906 = vpack.c.b16 %v882, %v879
    %v907 = vpack.c.b16 %v883, %v880
    %v908 = vpack.c.b16 %v884, %v881
    %933 = vmatprep.subr.bf16.mxu0 %v886
    %934 = vmatpush1.bf16.msra.mxu0 %v885
    %935 = vmatprep.subr.bf16.mxu0 %v889
    %936 = vmatpush1.bf16.msra.mxu0 %v888
    %937 = vmatprep.subr.bf16.mxu0 %v892
    %938 = vmatpush1.bf16.msra.mxu0 %v891
    %939 = vmatprep.subr.bf16.mxu0 %v895
    %940 = vmatpush1.bf16.msra.mxu0 %v894
    %941 = vmatprep.subr.bf16.mxu0 %v898
    %942 = vmatpush1.bf16.msra.mxu0 %v897
    %943 = vmatprep.subr.bf16.mxu0 %v901
    %944 = vmatpush1.bf16.msra.mxu0 %v900
    %945 = vmatprep.subr.bf16.mxu0 %v904
    %946 = vmatpush1.bf16.msra.mxu0 %v903
    %947 = vmatprep.subr.bf16.mxu0 %v907
    %948 = vmatpush1.bf16.msra.mxu0 %v906
    %949 = vmatprep.subr.bf16.mxu0 0
    %950 = vmatpush1.bf16.msra.mxu0 0
    %951 = vmatprep.subr.bf16.mxu0 0
    %952 = vmatpush1.bf16.msra.mxu0 0
    %953 = vmatprep.subr.bf16.mxu0 0
    %954 = vmatpush1.bf16.msra.mxu0 0
    %955 = vmatprep.subr.bf16.mxu0 0
    %956 = vmatpush1.bf16.msra.mxu0 0
    %957 = vmatprep.subr.bf16.mxu0 0
    %958 = vmatpush1.bf16.msra.mxu0 0
    %959 = vmatprep.subr.bf16.mxu0 0
    %960 = vmatpush1.bf16.msra.mxu0 0
    %961 = vmatprep.subr.bf16.mxu0 0
    %962 = vmatpush1.bf16.msra.mxu0 0
    %963 = vmatprep.subr.bf16.mxu0 0
    %964 = vmatpush1.bf16.msra.mxu0 0
    %965 = vmatprep.mubr.bf16.mxu0 0
    %966 = vmatmul.mubr.bf16.gmra.mrb[0].mxu0 %v755
    %v967 = vpop.f32.mrb[0].mxu0
    %v968 = vadd.f32 %v793, %v967
    %v969 = vpop.f32.mrb[0].mxu0
    %v970 = vadd.f32 %v797, %v969
    %v971 = vpop.f32.mrb[0].mxu0
    %v972 = vpop.f32.mrb[0].mxu0
    %973 = vdwg.mxu0
    %974 = vmatprep.subr.bf16.mxu0 0
    %975 = vmatpush1.bf16.msra.mxu0 %v887
    %976 = vmatprep.subr.bf16.mxu0 0
    %977 = vmatpush1.bf16.msra.mxu0 %v890
    %978 = vmatprep.subr.bf16.mxu0 0
    %979 = vmatpush1.bf16.msra.mxu0 %v893
    %980 = vmatprep.subr.bf16.mxu0 0
    %981 = vmatpush1.bf16.msra.mxu0 %v896
    %982 = vmatprep.subr.bf16.mxu0 0
    %983 = vmatpush1.bf16.msra.mxu0 %v899
    %984 = vmatprep.subr.bf16.mxu0 0
    %985 = vmatpush1.bf16.msra.mxu0 %v902
    %986 = vmatprep.subr.bf16.mxu0 0
    %987 = vmatpush1.bf16.msra.mxu0 %v905
    %988 = vmatprep.subr.bf16.mxu0 0
    %989 = vmatpush1.bf16.msra.mxu0 %v908
    %990 = vmatprep.subr.bf16.mxu0 0
    %991 = vmatpush1.bf16.msra.mxu0 0
    %992 = vmatprep.subr.bf16.mxu0 0
    %993 = vmatpush1.bf16.msra.mxu0 0
    %994 = vmatprep.subr.bf16.mxu0 0
    %995 = vmatpush1.bf16.msra.mxu0 0
    %996 = vmatprep.subr.bf16.mxu0 0
    %997 = vmatpush1.bf16.msra.mxu0 0
    %998 = vmatprep.subr.bf16.mxu0 0
    %999 = vmatpush1.bf16.msra.mxu0 0
    %1000 = vmatprep.subr.bf16.mxu0 0
    %1001 = vmatpush1.bf16.msra.mxu0 0
    %1002 = vmatprep.subr.bf16.mxu0 0
    %1003 = vmatpush1.bf16.msra.mxu0 0
    %1004 = vmatprep.subr.bf16.mxu0 0
    %1005 = vmatpush1.bf16.msra.mxu0 0
    %1006 = vmatprep.mubr.bf16.mxu0 0
    %1007 = vmatmul.mubr.bf16.gmra.mrb[0].mxu0 %v755
    %v1008 = vpop.f32.mrb[0].mxu0
    %v1009 = vadd.f32 %v801, %v1008
    %v1010 = vpop.f32.mrb[0].mxu0
    %v1011 = vpop.f32.mrb[0].mxu0
    %v1012 = vpop.f32.mrb[0].mxu0
    %1013 = vdwg.mxu0
    %v1014 = vmul.f32 %v1009, 0.5
    %v1015 = vtanh.pop %v1014
    %v1016 = vadd.f32 %v1015, 1.0
    %v1017 = vmul.f32 %v1016, 0.5
    %v1018 = vmax.f32 %v968, 0.0
    %1020 = vset.pattern.permute.xlu0 0
    %1021 = vperm.xlu0 %1020, %v1017
    %v1022 = vpop.permute.xlu0 %1021
    %v1024 = vmul.f32 %v1022, %v1018
    %v1025 = vadd.f32 %v754, %v1024
    %v1026 = vsub.f32 1.0, %v1017
    %v1027 = vmax.f32 %v970, 0.0
    %1029 = vset.pattern.permute.xlu0 0
    %1030 = vperm.xlu0 %1029, %v1026
    %v1031 = vpop.permute.xlu0 %1030
    %v1033 = vmul.f32 %v1031, %v1027
    %v1034 = vadd.f32 %v1025, %v1033
    %v1035 = vld [vmem:[%s5] sm:$0xf]
    %v1036 = vpack.c.bf16 %v1034, %v1034
    %v1037 = vld [vmem:[#allocation2] sm:$0x1]
    %v1039 = vlaneseq
    %v1040 = vshrl.u32 %v1039, 7
    %v1041 = vsub.s32 0, %v1040
    %v1042 = vrot.slane %v1037, %v1041
    %1043 = vset.pattern.permute.xlu0 0
    %1044 = vperm.xlu0 %1043, %v1042
    %v1045 = vpop.permute.xlu0 %1044
    %1047 = vmatprep.subr.bf16.mxu0 0
    %1048 = vmatpush1.bf16.xpose.msra.mxu0 %v1036
    %1049 = vmatprep.subr.bf16.mxu0 0
    %1050 = vmatpush1.bf16.xpose.msra.mxu0 0
    %1051 = vmatprep.subr.bf16.mxu0 0
    %1052 = vmatpush1.bf16.xpose.msra.mxu0 0
    %1053 = vmatprep.subr.bf16.mxu0 0
    %1054 = vmatpush1.bf16.xpose.msra.mxu0 0
    %1055 = vmatprep.subr.bf16.mxu0 0
    %1056 = vmatpush1.bf16.xpose.msra.mxu0 0
    %1057 = vmatprep.subr.bf16.mxu0 0
    %1058 = vmatpush1.bf16.xpose.msra.mxu0 0
    %1059 = vmatprep.subr.bf16.mxu0 0
    %1060 = vmatpush1.bf16.xpose.msra.mxu0 0
    %1061 = vmatprep.subr.bf16.mxu0 0
    %1062 = vmatpush1.bf16.xpose.msra.mxu0 0
    %1063 = vmatprep.subr.bf16.mxu0 0
    %1064 = vmatpush1.bf16.xpose.msra.mxu0 0
    %1065 = vmatprep.subr.bf16.mxu0 0
    %1066 = vmatpush1.bf16.xpose.msra.mxu0 0
    %1067 = vmatprep.subr.bf16.mxu0 0
    %1068 = vmatpush1.bf16.xpose.msra.mxu0 0
    %1069 = vmatprep.subr.bf16.mxu0 0
    %1070 = vmatpush1.bf16.xpose.msra.mxu0 0
    %1071 = vmatprep.subr.bf16.mxu0 0
    %1072 = vmatpush1.bf16.xpose.msra.mxu0 0
    %1073 = vmatprep.subr.bf16.mxu0 0
    %1074 = vmatpush1.bf16.xpose.msra.mxu0 0
    %1075 = vmatprep.subr.bf16.mxu0 0
    %1076 = vmatpush1.bf16.xpose.msra.mxu0 0
    %1077 = vmatprep.subr.bf16.mxu0 0
    %1078 = vmatpush1.bf16.xpose.msra.mxu0 0
    %1079 = vmatprep.mubr.bf16.mxu0 0
    %1080 = vmatmul.mubr.bf16.gmra.mrb[0].mxu0 %v1035
    %v1081 = vpop.f32.mrb[0].mxu0
    %v1082 = vadd.f32 %v1045, %v1081
    %v1083 = vpop.f32.mrb[0].mxu0
    %v1084 = vpop.f32.mrb[0].mxu0
    %v1085 = vpop.f32.mrb[0].mxu0
    %1086 = vdwg.mxu0
    %vm1087 = vcmask 64512
    %1088 = vst.msk [vmem:[%s7] sm:$0xff] %vm1087, %v1082
    // Predicated region
    $region34: #{neurodyn_expert_forward.1} parent=1 // pred_check
      _
    $region35: #{neurodyn_expert_forward.1} parent=1 // pred_check_branch
      %1090 = sbr.rel (0) target = $region37
    $region36: #{neurodyn_expert_forward.1} parent=1 // pred_region
      _
    $region37: #{neurodyn_expert_forward.1} parent=1 // pred_fallthru
      _
    // Predicated region
    $region38: #{neurodyn_expert_forward.1} parent=1 // pred_check
      _
    $region39: #{neurodyn_expert_forward.1} parent=1 // pred_check_branch
      %1092 = sbr.rel (0) target = $region41
    $region40: #{neurodyn_expert_forward.1} parent=1 // pred_region
      _
    $region41: #{neurodyn_expert_forward.1} parent=1 // pred_fallthru
      _
    %1093 = vsyncpa [#allocation4], 1

</llo_original>
